<compile_context>
chip_gen: v7x
topology: tpu7x:2x2x1
jax: 0.10.0
libtpu: 0.0.40
codegen_flags: <defaults>
</compile_context>

<pallas_src>
import jax
import jax.numpy as jnp
from jax.experimental import pallas as pl
from jax.experimental.pallas import tpu as pltpu


def _round_up(x, m):
    return ((x + m - 1) // m) * m


def _grasp_kernel(gf_ref, ap_ref,
                  aw1_ref, ab1_ref,
                  waf_ref,               # fused aw2 @ gw1b  (32, H1)
                  gw1a_ref, gb1_ref,     # gb1 already includes ab2 @ gw1b
                  gw2_ref, gb2_ref,
                  gw3_ref, gb3_ref,
                  out_ref):
    # --- approach encoder layer 1: (tb, 3) x (3, 32) done as 3 VPU FMAs ----
    ap = ap_ref[...].astype(jnp.float32)          # (tb, 3)
    aw1 = aw1_ref[...].astype(jnp.float32)        # (3, 32)
    h = (ap[:, 0:1] * aw1[0:1, :]
         + ap[:, 1:2] * aw1[1:2, :]
         + ap[:, 2:3] * aw1[2:3, :]
         + ab1_ref[...])                          # (tb, 32), f32
    h = jnp.maximum(h, 0.0)

    # --- grasp layer 1 on cat([gf, approach_feat]) as a split matmul, with the
    #     second approach-encoder Linear fused into waf / gb1 -----------------
    x1 = (jnp.dot(gf_ref[...], gw1a_ref[...],
                  preferred_element_type=jnp.float32)
          + jnp.dot(h.astype(waf_ref.dtype), waf_ref[...],
                    preferred_element_type=jnp.float32)
          + gb1_ref[...])
    h1 = jnp.maximum(x1, 0.0)                     # f32 accumulator

    # --- grasp layer 2 + ReLU ----------------------------------------------
    h2 = (jnp.dot(h1.astype(gw2_ref.dtype), gw2_ref[...],
                  preferred_element_type=jnp.float32)
          + gb2_ref[...])
    h2 = jnp.maximum(h2, 0.0)

    # --- grasp layer 3 (no activation) --------------------------------------
    out_ref[...] = (jnp.dot(h2.astype(gw3_ref.dtype), gw3_ref[...],
                            preferred_element_type=jnp.float32)
                    + gb3_ref[...]).astype(out_ref.dtype)


def grasp_pose_predictor(global_feats, approach_point, params,
                         *, tile_b=None, stream_dtype=jnp.bfloat16):
    """Pallas forward.

    global_feats: (B, Dg) -- streamed AS PROVIDED (pass bf16 to get bf16 streaming;
    the wrapper intentionally does not astype it, to avoid an extra HBM pass).
    approach_point: (B, 3) or (3,) (mirrors the PyTorch unsqueeze branch).
    stream_dtype applies to the large weights; accumulation is always f32.
    """
    B, Dg = global_feats.shape
    if approach_point.ndim == 1:
        # PyTorch's 1-D branch; broadcast so every row tile reads valid data.
        approach_point = jnp.broadcast_to(approach_point[None, :], (B, 3))

    grasp_dim = params["gw3"].shape[1]

    # --- exact fusion of approach-encoder layer 2 into grasp layer 1 --------
    w_af = (params["aw2"] @ params["gw1b"]).astype(stream_dtype)       # (32, H1)
    gb1_fused = (params["gb1"] + params["ab2"] @ params["gw1b"]
                 ).astype(jnp.float32)                                 # (1, H1)

    gw1a = params["gw1a"].astype(stream_dtype)
    gw2 = params["gw2"].astype(stream_dtype)
    gw3 = params["gw3"].astype(stream_dtype)
    aw1 = params["aw1"].astype(jnp.float32)
    ab1 = params["ab1"].astype(jnp.float32)
    gb2 = params["gb2"].astype(jnp.float32)
    gb3 = params["gb3"].astype(jnp.float32)

    gf = global_feats                       # no wrapper-side cast of the big stream
    ap = approach_point.astype(jnp.float32)  # tiny (B x 3)

    # --- row tiling ----------------------------------------------------------
    itemsize = jnp.dtype(gf.dtype).itemsize
    sub = 8 * max(1, 4 // itemsize)          # sublane multiple: 8 (f32), 16 (bf16)
    if tile_b is None:
        tile_b = 2048 if itemsize <= 2 else 1024   # fits default scoped VMEM everywhere
    tile_b = max(1, min(tile_b, B))
    if B > 2 * sub:
        # keep >= 2 row tiles so v7x's two TensorCores both get work
        tile_b = min(tile_b, _round_up(pl.cdiv(B, 2), sub))
    if tile_b >= B:
        tile_b = B                            # single full-extent block (always legal)
    else:
        tile_b = _round_up(tile_b, sub)       # sublane-aligned; last block may be ragged
    grid = (pl.cdiv(B, tile_b),)              # ragged last block: OOB rows masked on write

    def row_spec(width):
        return pl.BlockSpec((tile_b, width), lambda i: (i, 0))

    def resident_spec(arr):
        # Full-array block, same block index every grid step -> DMA'd once, stays resident.
        return pl.BlockSpec(arr.shape, lambda i: (0, 0))

    weights = (aw1, ab1, w_af, gw1a, gb1_fused, gw2, gb2, gw3, gb3)

    out = pl.pallas_call(
        _grasp_kernel,
        out_shape=jax.ShapeDtypeStruct((B, grasp_dim), jnp.float32),
        grid=grid,
        in_specs=[row_spec(Dg), row_spec(3)] + [resident_spec(w) for w in weights],
        out_specs=row_spec(grasp_dim),
        compiler_params=pltpu.CompilerParams(
            dimension_semantics=("parallel",)),
    )(gf, ap, *weights)

    return out


def init_params(key, global_feat_dim=256, approach_feat_dim=64, grasp_dim=16):
    """Deterministic synthetic parameters (nn.Linear shapes, stored as (in, out))."""
    ks = jax.random.split(key, 5)
    Dg = global_feat_dim + 128 + 256            # width of global_feats (implied by cat)
    Din = global_feat_dim + approach_feat_dim + 128 + 256
    H1 = global_feat_dim // 2
    H2 = global_feat_dim // 4

    def lin(k, fan_in, fan_out):
        bound = 1.0 / jnp.sqrt(fan_in)
        kw, kb = jax.random.split(k)
        w = jax.random.uniform(kw, (fan_in, fan_out), jnp.float32, -bound, bound)
        b = jax.random.uniform(kb, (1, fan_out), jnp.float32, -bound, bound)
        return w, b

    aw1, ab1 = lin(ks[0], 3, 32)
    aw2, ab2 = lin(ks[1], 32, approach_feat_dim)
    gw1, gb1 = lin(ks[2], Din, H1)
    gw2, gb2 = lin(ks[3], H1, H2)
    gw3, gb3 = lin(ks[4], H2, grasp_dim)

    return dict(
        aw1=aw1, ab1=ab1, aw2=aw2, ab2=ab2,
        # split first grasp-predictor weight along input dim: [global | approach]
        gw1a=gw1[:Dg], gw1b=gw1[Dg:], gb1=gb1,
        gw2=gw2, gb2=gb2, gw3=gw3, gb3=gb3,
    ), Dg


def reference_forward(global_feats, approach_point, params):
    """Pure-JAX f32 reference mirroring the PyTorch forward."""
    h = jnp.maximum(approach_point @ params["aw1"] + params["ab1"], 0.0)
    af = h @ params["aw2"] + params["ab2"]
    x = jnp.concatenate([global_feats, af], axis=1)
    w1 = jnp.concatenate([params["gw1a"], params["gw1b"]], axis=0)
    h1 = jnp.maximum(x @ w1 + params["gb1"], 0.0)
    h2 = jnp.maximum(h1 @ params["gw2"] + params["gb2"], 0.0)
    return h2 @ params["gw3"] + params["gb3"]


if __name__ == "__main__":
    key = jax.random.PRNGKey(0)
    k_params, k_gf, k_ap = jax.random.split(key, 3)

    global_feat_dim = 256
    approach_feat_dim = 64
    grasp_dim = 16
    B = 36   # not a multiple of the row tiles -> exercises the ragged last block

    params, Dg = init_params(k_params, global_feat_dim, approach_feat_dim, grasp_dim)

    global_feats = jax.random.normal(k_gf, (B, Dg), jnp.float32)
    approach_point = jax.random.normal(k_ap, (B, 3), jnp.float32)
    ref = reference_forward(global_feats, approach_point, params)

    # --- f32 path, small tile -> multi-step grid + ragged last block (tight tol) ---
    out_f32 = grasp_pose_predictor(global_feats, approach_point, params,
                                   tile_b=8, stream_dtype=jnp.float32)
    jax.block_until_ready(out_f32)
    assert out_f32.shape == (B, grasp_dim)
    assert jnp.allclose(out_f32, ref, atol=1e-4, rtol=1e-4), "f32 path mismatch"

    # --- default bf16-streaming path: caller supplies bf16 global_feats (no wrapper cast) ---
    gf_bf16 = global_feats.astype(jnp.bfloat16)   # stands in for an upstream bf16 producer
    out_bf16 = grasp_pose_predictor(gf_bf16, approach_point, params)
    jax.block_until_ready(out_bf16)
    assert out_bf16.shape == (B, grasp_dim)
    assert jnp.allclose(out_bf16, ref, atol=5e-2, rtol=5e-2), "bf16 path drift too large"

    # --- PyTorch 1-D approach_point branch (single-row global_feats) ---
    out_1d = grasp_pose_predictor(global_feats[:1], approach_point[0], params,
                                  stream_dtype=jnp.float32)
    jax.block_until_ready(out_1d)
    assert jnp.allclose(out_1d, ref[:1], atol=1e-4, rtol=1e-4), "1-D branch mismatch"

    print("KERNEL_OK")
</pallas_src>

<mosaic_0001>
module attributes {stable_mosaic.version = 11 : i64} {
  func.func @_grasp_kernel(%arg0: i32, %arg1: memref<8x640xf32, #tpu.memory_space<vmem>>, %arg2: memref<8x3xf32, #tpu.memory_space<vmem>>, %arg3: memref<3x32xf32, #tpu.memory_space<vmem>>, %arg4: memref<1x32xf32, #tpu.memory_space<vmem>>, %arg5: memref<32x128xf32, #tpu.memory_space<vmem>>, %arg6: memref<640x128xf32, #tpu.memory_space<vmem>>, %arg7: memref<1x128xf32, #tpu.memory_space<vmem>>, %arg8: memref<128x64xf32, #tpu.memory_space<vmem>>, %arg9: memref<1x64xf32, #tpu.memory_space<vmem>>, %arg10: memref<64x16xf32, #tpu.memory_space<vmem>>, %arg11: memref<1x16xf32, #tpu.memory_space<vmem>>, %arg12: memref<8x16xf32, #tpu.memory_space<vmem>>) attributes {dimension_semantics = [#tpu.dimension_semantics<parallel>], iteration_bounds = array<i64: 5>, scalar_prefetch = 0 : i64, scratch_operands = 0 : i64, tpu.core_type = #tpu.core_type<tc>, window_params = [{transform_indices = @transform_0, window_bounds = array<i64: 8, 640>}, {transform_indices = @transform_1, window_bounds = array<i64: 8, 3>}, {pipeline_mode = #tpu.pipeline_mode<synchronous>, transform_indices = @transform_2, window_bounds = array<i64: 3, 32>}, {pipeline_mode = #tpu.pipeline_mode<synchronous>, transform_indices = @transform_3, window_bounds = array<i64: 1, 32>}, {pipeline_mode = #tpu.pipeline_mode<synchronous>, transform_indices = @transform_4, window_bounds = array<i64: 32, 128>}, {pipeline_mode = #tpu.pipeline_mode<synchronous>, transform_indices = @transform_5, window_bounds = array<i64: 640, 128>}, {pipeline_mode = #tpu.pipeline_mode<synchronous>, transform_indices = @transform_6, window_bounds = array<i64: 1, 128>}, {pipeline_mode = #tpu.pipeline_mode<synchronous>, transform_indices = @transform_7, window_bounds = array<i64: 128, 64>}, {pipeline_mode = #tpu.pipeline_mode<synchronous>, transform_indices = @transform_8, window_bounds = array<i64: 1, 64>}, {pipeline_mode = #tpu.pipeline_mode<synchronous>, transform_indices = @transform_9, window_bounds = array<i64: 64, 16>}, {pipeline_mode = #tpu.pipeline_mode<synchronous>, transform_indices = @transform_10, window_bounds = array<i64: 1, 16>}, {transform_indices = @transform_11, window_bounds = array<i64: 8, 16>}]} {
    %c0 = arith.constant 0 : index
    %c0_0 = arith.constant 0 : index
    %0 = vector.load %arg2[%c0, %c0_0] : memref<8x3xf32, #tpu.memory_space<vmem>>, vector<8x3xf32>
    %c0_1 = arith.constant 0 : index
    %c0_2 = arith.constant 0 : index
    %1 = vector.load %arg3[%c0_1, %c0_2] : memref<3x32xf32, #tpu.memory_space<vmem>>, vector<3x32xf32>
    %2 = vector.extract_strided_slice %0 {offsets = [0, 0], sizes = [8, 1], strides = [1, 1]} : vector<8x3xf32> to vector<8x1xf32>
    %3 = vector.extract_strided_slice %1 {offsets = [0, 0], sizes = [1, 32], strides = [1, 1]} : vector<3x32xf32> to vector<1x32xf32>
    %4 = vector.broadcast %2 : vector<8x1xf32> to vector<8x32xf32>
    %5 = vector.broadcast %3 : vector<1x32xf32> to vector<8x32xf32>
    %6 = arith.mulf %4, %5 : vector<8x32xf32>
    %7 = vector.extract_strided_slice %0 {offsets = [0, 1], sizes = [8, 1], strides = [1, 1]} : vector<8x3xf32> to vector<8x1xf32>
    %8 = vector.extract_strided_slice %1 {offsets = [1, 0], sizes = [1, 32], strides = [1, 1]} : vector<3x32xf32> to vector<1x32xf32>
    %9 = vector.broadcast %7 : vector<8x1xf32> to vector<8x32xf32>
    %10 = vector.broadcast %8 : vector<1x32xf32> to vector<8x32xf32>
    %11 = arith.mulf %9, %10 : vector<8x32xf32>
    %12 = arith.addf %6, %11 : vector<8x32xf32>
    %13 = vector.extract_strided_slice %0 {offsets = [0, 2], sizes = [8, 1], strides = [1, 1]} : vector<8x3xf32> to vector<8x1xf32>
    %14 = vector.extract_strided_slice %1 {offsets = [2, 0], sizes = [1, 32], strides = [1, 1]} : vector<3x32xf32> to vector<1x32xf32>
    %15 = vector.broadcast %13 : vector<8x1xf32> to vector<8x32xf32>
    %16 = vector.broadcast %14 : vector<1x32xf32> to vector<8x32xf32>
    %17 = arith.mulf %15, %16 : vector<8x32xf32>
    %18 = arith.addf %12, %17 : vector<8x32xf32>
    %c0_3 = arith.constant 0 : index
    %c0_4 = arith.constant 0 : index
    %19 = vector.load %arg4[%c0_3, %c0_4] : memref<1x32xf32, #tpu.memory_space<vmem>>, vector<1x32xf32>
    %20 = vector.broadcast %19 : vector<1x32xf32> to vector<8x32xf32>
    %21 = arith.addf %18, %20 : vector<8x32xf32>
    %cst = arith.constant 0.000000e+00 : f32
    %22 = vector.broadcast %cst : f32 to vector<8x32xf32>
    %23 = arith.maximumf %21, %22 : vector<8x32xf32>
    %c0_5 = arith.constant 0 : index
    %c0_6 = arith.constant 0 : index
    %24 = vector.load %arg1[%c0_5, %c0_6] : memref<8x640xf32, #tpu.memory_space<vmem>>, vector<8x640xf32>
    %c0_7 = arith.constant 0 : index
    %c0_8 = arith.constant 0 : index
    %25 = vector.load %arg6[%c0_7, %c0_8] : memref<640x128xf32, #tpu.memory_space<vmem>>, vector<640x128xf32>
    %cst_9 = arith.constant dense<0.000000e+00> : vector<8x128xf32>
    %26 = tpu.matmul %24, %25, %cst_9 {dimension_numbers = #tpu.dot_dimension_numbers<[1], [0], [0], [1], [0, 0, 1, 1], [], []>} : vector<8x640xf32>, vector<640x128xf32>, vector<8x128xf32> -> vector<8x128xf32>
    %c0_10 = arith.constant 0 : index
    %c0_11 = arith.constant 0 : index
    %27 = vector.load %arg5[%c0_10, %c0_11] : memref<32x128xf32, #tpu.memory_space<vmem>>, vector<32x128xf32>
    %cst_12 = arith.constant dense<0.000000e+00> : vector<8x128xf32>
    %28 = tpu.matmul %23, %27, %cst_12 {dimension_numbers = #tpu.dot_dimension_numbers<[1], [0], [0], [1], [0, 0, 1, 1], [], []>} : vector<8x32xf32>, vector<32x128xf32>, vector<8x128xf32> -> vector<8x128xf32>
    %29 = arith.addf %26, %28 : vector<8x128xf32>
    %c0_13 = arith.constant 0 : index
    %c0_14 = arith.constant 0 : index
    %30 = vector.load %arg7[%c0_13, %c0_14] : memref<1x128xf32, #tpu.memory_space<vmem>>, vector<1x128xf32>
    %31 = vector.broadcast %30 : vector<1x128xf32> to vector<8x128xf32>
    %32 = arith.addf %29, %31 : vector<8x128xf32>
    %cst_15 = arith.constant 0.000000e+00 : f32
    %33 = vector.broadcast %cst_15 : f32 to vector<8x128xf32>
    %34 = arith.maximumf %32, %33 : vector<8x128xf32>
    %c0_16 = arith.constant 0 : index
    %c0_17 = arith.constant 0 : index
    %35 = vector.load %arg8[%c0_16, %c0_17] : memref<128x64xf32, #tpu.memory_space<vmem>>, vector<128x64xf32>
    %cst_18 = arith.constant dense<0.000000e+00> : vector<8x64xf32>
    %36 = tpu.matmul %34, %35, %cst_18 {dimension_numbers = #tpu.dot_dimension_numbers<[1], [0], [0], [1], [0, 0, 1, 1], [], []>} : vector<8x128xf32>, vector<128x64xf32>, vector<8x64xf32> -> vector<8x64xf32>
    %c0_19 = arith.constant 0 : index
    %c0_20 = arith.constant 0 : index
    %37 = vector.load %arg9[%c0_19, %c0_20] : memref<1x64xf32, #tpu.memory_space<vmem>>, vector<1x64xf32>
    %38 = vector.broadcast %37 : vector<1x64xf32> to vector<8x64xf32>
    %39 = arith.addf %36, %38 : vector<8x64xf32>
    %cst_21 = arith.constant 0.000000e+00 : f32
    %40 = vector.broadcast %cst_21 : f32 to vector<8x64xf32>
    %41 = arith.maximumf %39, %40 : vector<8x64xf32>
    %c0_22 = arith.constant 0 : index
    %c0_23 = arith.constant 0 : index
    %42 = vector.load %arg10[%c0_22, %c0_23] : memref<64x16xf32, #tpu.memory_space<vmem>>, vector<64x16xf32>
    %cst_24 = arith.constant dense<0.000000e+00> : vector<8x16xf32>
    %43 = tpu.matmul %41, %42, %cst_24 {dimension_numbers = #tpu.dot_dimension_numbers<[1], [0], [0], [1], [0, 0, 1, 1], [], []>} : vector<8x64xf32>, vector<64x16xf32>, vector<8x16xf32> -> vector<8x16xf32>
    %c0_25 = arith.constant 0 : index
    %c0_26 = arith.constant 0 : index
    %44 = vector.load %arg11[%c0_25, %c0_26] : memref<1x16xf32, #tpu.memory_space<vmem>>, vector<1x16xf32>
    %45 = vector.broadcast %44 : vector<1x16xf32> to vector<8x16xf32>
    %46 = arith.addf %43, %45 : vector<8x16xf32>
    %c0_27 = arith.constant 0 : index
    %c0_28 = arith.constant 0 : index
    %47 = vector.load %arg12[%c0_27, %c0_28] : memref<8x16xf32, #tpu.memory_space<vmem>>, vector<8x16xf32>
    tpu.vector_store %arg12[%c0_27, %c0_28], %46 {strides = array<i32>} : memref<8x16xf32, #tpu.memory_space<vmem>>, vector<8x16xf32>,
    return
  }
  func.func @transform_0(%arg0: i32) -> (i32, i32) {
    %c0_i32 = arith.constant 0 : i32
    %c0_i32_0 = arith.constant 0 : i32
    return %arg0, %c0_i32 : i32, i32
  }
  func.func @transform_1(%arg0: i32) -> (i32, i32) {
    %c0_i32 = arith.constant 0 : i32
    %c0_i32_0 = arith.constant 0 : i32
    return %arg0, %c0_i32 : i32, i32
  }
  func.func @transform_2(%arg0: i32) -> (i32, i32) {
    %c0_i32 = arith.constant 0 : i32
    %c0_i32_0 = arith.constant 0 : i32
    %c0_i32_1 = arith.constant 0 : i32
    return %c0_i32, %c0_i32_0 : i32, i32
  }
  func.func @transform_3(%arg0: i32) -> (i32, i32) {
    %c0_i32 = arith.constant 0 : i32
    %c0_i32_0 = arith.constant 0 : i32
    %c0_i32_1 = arith.constant 0 : i32
    return %c0_i32, %c0_i32_0 : i32, i32
  }
  func.func @transform_4(%arg0: i32) -> (i32, i32) {
    %c0_i32 = arith.constant 0 : i32
    %c0_i32_0 = arith.constant 0 : i32
    %c0_i32_1 = arith.constant 0 : i32
    return %c0_i32, %c0_i32_0 : i32, i32
  }
  func.func @transform_5(%arg0: i32) -> (i32, i32) {
    %c0_i32 = arith.constant 0 : i32
    %c0_i32_0 = arith.constant 0 : i32
    %c0_i32_1 = arith.constant 0 : i32
    return %c0_i32, %c0_i32_0 : i32, i32
  }
  func.func @transform_6(%arg0: i32) -> (i32, i32) {
    %c0_i32 = arith.constant 0 : i32
    %c0_i32_0 = arith.constant 0 : i32
    %c0_i32_1 = arith.constant 0 : i32
    return %c0_i32, %c0_i32_0 : i32, i32
  }
  func.func @transform_7(%arg0: i32) -> (i32, i32) {
    %c0_i32 = arith.constant 0 : i32
    %c0_i32_0 = arith.constant 0 : i32
    %c0_i32_1 = arith.constant 0 : i32
    return %c0_i32, %c0_i32_0 : i32, i32
  }
  func.func @transform_8(%arg0: i32) -> (i32, i32) {
    %c0_i32 = arith.constant 0 : i32
    %c0_i32_0 = arith.constant 0 : i32
    %c0_i32_1 = arith.constant 0 : i32
    return %c0_i32, %c0_i32_0 : i32, i32
  }
  func.func @transform_9(%arg0: i32) -> (i32, i32) {
    %c0_i32 = arith.constant 0 : i32
    %c0_i32_0 = arith.constant 0 : i32
    %c0_i32_1 = arith.constant 0 : i32
    return %c0_i32, %c0_i32_0 : i32, i32
  }
  func.func @transform_10(%arg0: i32) -> (i32, i32) {
    %c0_i32 = arith.constant 0 : i32
    %c0_i32_0 = arith.constant 0 : i32
    %c0_i32_1 = arith.constant 0 : i32
    return %c0_i32, %c0_i32_0 : i32, i32
  }
  func.func @transform_11(%arg0: i32) -> (i32, i32) {
    %c0_i32 = arith.constant 0 : i32
    %c0_i32_0 = arith.constant 0 : i32
    return %arg0, %c0_i32 : i32, i32
  }
}

</mosaic_0001>

<llo_original>
// kernel: tpu_custom_call.1
$region0: #{tpu_custom_call.1}
  #allocation0 [shape = 'u32[]', space=smem, size = 0x4, offset = 0x4, fixed_abs, tag = 'smem constant byte address 0x4 - core index']
  #allocation1 [shape = 'u32[144,128]{1,0:T(1,128)}', space=vmem, size = 0x12000, scoped, tag = 'internal scratch']
  %s0 = inlined_call_operand.vmem [shape: f32[36,640], index: 0, kind: input, shape index: {}]
  %s1 = inlined_call_operand.vmem [shape: f32[36,3], index: 1, kind: input, shape index: {}]
  %s2 = inlined_call_operand.vmem [shape: f32[3,32], index: 2, kind: input, shape index: {}]
  %s3 = inlined_call_operand.vmem [shape: f32[1,32], index: 3, kind: input, shape index: {}]
  %s4 = inlined_call_operand.vmem [shape: f32[32,128], index: 4, kind: input, shape index: {}]
  %s5 = inlined_call_operand.hbm [shape: f32[640,128], index: 5, kind: input, shape index: {}]
  %s6 = inlined_call_operand.vmem [shape: f32[1,128], index: 6, kind: input, shape index: {}]
  %s7 = inlined_call_operand.vmem [shape: f32[128,64], index: 7, kind: input, shape index: {}]
  %s8 = inlined_call_operand.vmem [shape: f32[1,64], index: 8, kind: input, shape index: {}]
  %s9 = inlined_call_operand.vmem [shape: f32[64,16], index: 9, kind: input, shape index: {}]
  %s10 = inlined_call_operand.vmem [shape: f32[1,16], index: 10, kind: input, shape index: {}]
  %s11 = inlined_call_operand.vmem [shape: f32[36,16], index: 11, kind: output, shape index: {}]
  %s12 = sld [smem:[#allocation0]]
  $region81: #{tpu_custom_call.1} parent=0
    _
  %s14 = ssub.s32 1, %s12
  %s15 = scalar_select 0, %s14, %s12
  $region1: #{tpu_custom_call.1} parent=0
    #allocation2 [shape = 'u8[327680]{0}', space=vmem, size = 0x50000, scoped, tag = 'input window, operand 5, single buffered']
    #allocation3 [shape = 's32[2]{0}', space=sflag, size = 0x8, scoped, tag = 'scoped memory for tpu_custom_call.1']
    %16 = vsyncpa [#allocation3], 0
    loop: start=0, step=1, limit=7
    $region2: #{tpu_custom_call.1} parent=1 // loop_pre_header
      _
    $region3: #{tpu_custom_call.1} parent=1 // loop_header
      %s18 = sphi 0, %s22
      %p19 = scmp.ge.s32.totalorder %s18, 7
      %s28 = sphi 0, %s30
      %s31 = sphi 0, %s28
      %s32 = sphi 0, %s31
      %s48 = sphi 0, %s32
      %s54 = sphi 0, %s56
      %s57 = sphi 0, %s54
      %s58 = sphi 0, %s57
      %s74 = sphi 0, %s58
      %s78 = sphi 0, %s78
      %s80 = sphi 0, %s78
      %s81 = sphi 0, %s80
      %s95 = sphi 0, %s81
      %s99 = sphi 0, %s99
      %s101 = sphi 0, %s99
      %s102 = sphi 0, %s101
      %s116 = sphi 0, %s102
      %s120 = sphi 0, %s120
      %s122 = sphi 0, %s120
      %s123 = sphi 0, %s122
      %s137 = sphi 0, %s123
      %s141 = sphi 0, %s141
      %s143 = sphi 0, %s141
      %s144 = sphi 0, %s143
      %s158 = sphi 0, %s144
      %s162 = sphi 0, %s162
      %s164 = sphi 0, %s162
      %s165 = sphi 0, %s164
      %s179 = sphi 0, %s165
      %s183 = sphi 0, %s183
      %s185 = sphi 0, %s183
      %s186 = sphi 0, %s185
      %s200 = sphi 0, %s186
      %s204 = sphi 0, %s204
      %s206 = sphi 0, %s204
      %s207 = sphi 0, %s206
      %s221 = sphi 0, %s207
      %s225 = sphi 0, %s225
      %s227 = sphi 0, %s225
      %s228 = sphi 0, %s227
      %s242 = sphi 0, %s228
      %s246 = sphi 0, %s246
      %s248 = sphi 0, %s246
      %s249 = sphi 0, %s248
      %s263 = sphi 0, %s249
      %s269 = sphi 0, %s271
      %s272 = sphi 0, %s269
      %s273 = sphi 0, %s272
      %s289 = sphi 0, %s273
    $region4: #{tpu_custom_call.1} parent=1 // loop_header_branch
      %21 = sbr.rel (%p19) target = $region8
    $region5: #{tpu_custom_call.1} parent=1 // loop_body
      %s23 = ssub.s32 %s18, 1
      %s24 = ssub.s32 %s18, 2
      %s25 = sadd.s32 %s18, 1
      %s26 = ssub.s32 %s18, %s25
      %p27 = scmp.eq.s32.totalorder %s26, 0
      %s29 = sadd.s32 %s28, 1
      %s30 = scalar_select %p27, %s28, %s29
      %p33 = pneg %p27
      %p34 = scmp.eq.s32.totalorder %s18, 4
      %p35 = por %p33, %p34
      %p36 = scmp.ne.s32.totalorder %s28, %s31
      %p37 = scmp.eq.s32.totalorder %s18, 0
      %p38 = por %p36, %p37
      %p39 = scmp.ne.s32.totalorder %s28, %s31
      %p40 = scmp.eq.s32.totalorder %s23, 4
      %p41 = por %p39, %p40
      %p42 = scmp.ne.s32.totalorder %s31, %s32
      %p43 = scmp.eq.s32.totalorder %s23, 0
      %p44 = por %p42, %p43
      %p45 = scmp.ne.s32.totalorder %s31, %s32
      %p46 = scmp.eq.s32.totalorder %s24, 4
      %p47 = por %p45, %p46
      %p49 = scmp.ne.s32.totalorder %s32, %s48
      %p50 = scmp.eq.s32.totalorder %s24, 0
      %p51 = por %p49, %p50
      %s52 = ssub.s32 %s18, %s25
      %p53 = scmp.eq.s32.totalorder %s52, 0
      %s55 = sadd.s32 %s54, 1
      %s56 = scalar_select %p53, %s54, %s55
      %p59 = pneg %p53
      %p60 = scmp.eq.s32.totalorder %s18, 4
      %p61 = por %p59, %p60
      %p62 = scmp.ne.s32.totalorder %s54, %s57
      %p63 = scmp.eq.s32.totalorder %s18, 0
      %p64 = por %p62, %p63
      %p65 = scmp.ne.s32.totalorder %s54, %s57
      %p66 = scmp.eq.s32.totalorder %s23, 4
      %p67 = por %p65, %p66
      %p68 = scmp.ne.s32.totalorder %s57, %s58
      %p69 = scmp.eq.s32.totalorder %s23, 0
      %p70 = por %p68, %p69
      %p71 = scmp.ne.s32.totalorder %s57, %s58
      %p72 = scmp.eq.s32.totalorder %s24, 4
      %p73 = por %p71, %p72
      %p75 = scmp.ne.s32.totalorder %s58, %s74
      %p76 = scmp.eq.s32.totalorder %s24, 0
      %p77 = por %p75, %p76
      %s79 = sadd.s32 %s78, 1
      %p82 = scmp.eq.s32.totalorder %s18, 4
      %p83 = scmp.ne.s32.totalorder %s78, %s80
      %p84 = scmp.eq.s32.totalorder %s18, 0
      %p85 = por %p83, %p84
      %p86 = scmp.ne.s32.totalorder %s78, %s80
      %p87 = scmp.eq.s32.totalorder %s23, 4
      %p88 = por %p86, %p87
      %p89 = scmp.ne.s32.totalorder %s80, %s81
      %p90 = scmp.eq.s32.totalorder %s23, 0
      %p91 = por %p89, %p90
      %p92 = scmp.ne.s32.totalorder %s80, %s81
      %p93 = scmp.eq.s32.totalorder %s24, 4
      %p94 = por %p92, %p93
      %p96 = scmp.ne.s32.totalorder %s81, %s95
      %p97 = scmp.eq.s32.totalorder %s24, 0
      %p98 = por %p96, %p97
      %s100 = sadd.s32 %s99, 1
      %p103 = scmp.eq.s32.totalorder %s18, 4
      %p104 = scmp.ne.s32.totalorder %s99, %s101
      %p105 = scmp.eq.s32.totalorder %s18, 0
      %p106 = por %p104, %p105
      %p107 = scmp.ne.s32.totalorder %s99, %s101
      %p108 = scmp.eq.s32.totalorder %s23, 4
      %p109 = por %p107, %p108
      %p110 = scmp.ne.s32.totalorder %s101, %s102
      %p111 = scmp.eq.s32.totalorder %s23, 0
      %p112 = por %p110, %p111
      %p113 = scmp.ne.s32.totalorder %s101, %s102
      %p114 = scmp.eq.s32.totalorder %s24, 4
      %p115 = por %p113, %p114
      %p117 = scmp.ne.s32.totalorder %s102, %s116
      %p118 = scmp.eq.s32.totalorder %s24, 0
      %p119 = por %p117, %p118
      %s121 = sadd.s32 %s120, 1
      %p124 = scmp.eq.s32.totalorder %s18, 4
      %p125 = scmp.ne.s32.totalorder %s120, %s122
      %p126 = scmp.eq.s32.totalorder %s18, 0
      %p127 = por %p125, %p126
      %p128 = scmp.ne.s32.totalorder %s120, %s122
      %p129 = scmp.eq.s32.totalorder %s23, 4
      %p130 = por %p128, %p129
      %p131 = scmp.ne.s32.totalorder %s122, %s123
      %p132 = scmp.eq.s32.totalorder %s23, 0
      %p133 = por %p131, %p132
      %p134 = scmp.ne.s32.totalorder %s122, %s123
      %p135 = scmp.eq.s32.totalorder %s24, 4
      %p136 = por %p134, %p135
      %p138 = scmp.ne.s32.totalorder %s123, %s137
      %p139 = scmp.eq.s32.totalorder %s24, 0
      %p140 = por %p138, %p139
      %s142 = sadd.s32 %s141, 1
      %p145 = scmp.eq.s32.totalorder %s18, 4
      %p146 = scmp.ne.s32.totalorder %s141, %s143
      %p147 = scmp.eq.s32.totalorder %s18, 0
      %p148 = por %p146, %p147
      %p149 = scmp.ne.s32.totalorder %s141, %s143
      %p150 = scmp.eq.s32.totalorder %s23, 4
      %p151 = por %p149, %p150
      %p152 = scmp.ne.s32.totalorder %s143, %s144
      %p153 = scmp.eq.s32.totalorder %s23, 0
      %p154 = por %p152, %p153
      %p155 = scmp.ne.s32.totalorder %s143, %s144
      %p156 = scmp.eq.s32.totalorder %s24, 4
      %p157 = por %p155, %p156
      %p159 = scmp.ne.s32.totalorder %s144, %s158
      %p160 = scmp.eq.s32.totalorder %s24, 0
      %p161 = por %p159, %p160
      %s163 = sadd.s32 %s162, 1
      %p166 = scmp.eq.s32.totalorder %s18, 4
      %p167 = scmp.ne.s32.totalorder %s162, %s164
      %p168 = scmp.eq.s32.totalorder %s18, 0
      %p169 = por %p167, %p168
      %p170 = scmp.ne.s32.totalorder %s162, %s164
      %p171 = scmp.eq.s32.totalorder %s23, 4
      %p172 = por %p170, %p171
      %p173 = scmp.ne.s32.totalorder %s164, %s165
      %p174 = scmp.eq.s32.totalorder %s23, 0
      %p175 = por %p173, %p174
      %p176 = scmp.ne.s32.totalorder %s164, %s165
      %p177 = scmp.eq.s32.totalorder %s24, 4
      %p178 = por %p176, %p177
      %p180 = scmp.ne.s32.totalorder %s165, %s179
      %p181 = scmp.eq.s32.totalorder %s24, 0
      %p182 = por %p180, %p181
      %s184 = sadd.s32 %s183, 1
      %p187 = scmp.eq.s32.totalorder %s18, 4
      %p188 = scmp.ne.s32.totalorder %s183, %s185
      %p189 = scmp.eq.s32.totalorder %s18, 0
      %p190 = por %p188, %p189
      %p191 = scmp.ne.s32.totalorder %s183, %s185
      %p192 = scmp.eq.s32.totalorder %s23, 4
      %p193 = por %p191, %p192
      %p194 = scmp.ne.s32.totalorder %s185, %s186
      %p195 = scmp.eq.s32.totalorder %s23, 0
      %p196 = por %p194, %p195
      %p197 = scmp.ne.s32.totalorder %s185, %s186
      %p198 = scmp.eq.s32.totalorder %s24, 4
      %p199 = por %p197, %p198
      %p201 = scmp.ne.s32.totalorder %s186, %s200
      %p202 = scmp.eq.s32.totalorder %s24, 0
      %p203 = por %p201, %p202
      %s205 = sadd.s32 %s204, 1
      %p208 = scmp.eq.s32.totalorder %s18, 4
      %p209 = scmp.ne.s32.totalorder %s204, %s206
      %p210 = scmp.eq.s32.totalorder %s18, 0
      %p211 = por %p209, %p210
      %p212 = scmp.ne.s32.totalorder %s204, %s206
      %p213 = scmp.eq.s32.totalorder %s23, 4
      %p214 = por %p212, %p213
      %p215 = scmp.ne.s32.totalorder %s206, %s207
      %p216 = scmp.eq.s32.totalorder %s23, 0
      %p217 = por %p215, %p216
      %p218 = scmp.ne.s32.totalorder %s206, %s207
      %p219 = scmp.eq.s32.totalorder %s24, 4
      %p220 = por %p218, %p219
      %p222 = scmp.ne.s32.totalorder %s207, %s221
      %p223 = scmp.eq.s32.totalorder %s24, 0
      %p224 = por %p222, %p223
      %s226 = sadd.s32 %s225, 1
      %p229 = scmp.eq.s32.totalorder %s18, 4
      %p230 = scmp.ne.s32.totalorder %s225, %s227
      %p231 = scmp.eq.s32.totalorder %s18, 0
      %p232 = por %p230, %p231
      %p233 = scmp.ne.s32.totalorder %s225, %s227
      %p234 = scmp.eq.s32.totalorder %s23, 4
      %p235 = por %p233, %p234
      %p236 = scmp.ne.s32.totalorder %s227, %s228
      %p237 = scmp.eq.s32.totalorder %s23, 0
      %p238 = por %p236, %p237
      %p239 = scmp.ne.s32.totalorder %s227, %s228
      %p240 = scmp.eq.s32.totalorder %s24, 4
      %p241 = por %p239, %p240
      %p243 = scmp.ne.s32.totalorder %s228, %s242
      %p244 = scmp.eq.s32.totalorder %s24, 0
      %p245 = por %p243, %p244
      %s247 = sadd.s32 %s246, 1
      %p250 = scmp.eq.s32.totalorder %s18, 4
      %p251 = scmp.ne.s32.totalorder %s246, %s248
      %p252 = scmp.eq.s32.totalorder %s18, 0
      %p253 = por %p251, %p252
      %p254 = scmp.ne.s32.totalorder %s246, %s248
      %p255 = scmp.eq.s32.totalorder %s23, 4
      %p256 = por %p254, %p255
      %p257 = scmp.ne.s32.totalorder %s248, %s249
      %p258 = scmp.eq.s32.totalorder %s23, 0
      %p259 = por %p257, %p258
      %p260 = scmp.ne.s32.totalorder %s248, %s249
      %p261 = scmp.eq.s32.totalorder %s24, 4
      %p262 = por %p260, %p261
      %p264 = scmp.ne.s32.totalorder %s249, %s263
      %p265 = scmp.eq.s32.totalorder %s24, 0
      %p266 = por %p264, %p265
      %s267 = ssub.s32 %s18, %s25
      %p268 = scmp.eq.s32.totalorder %s267, 0
      %s270 = sadd.s32 %s269, 1
      %s271 = scalar_select %p268, %s269, %s270
      %p274 = pneg %p268
      %p275 = scmp.eq.s32.totalorder %s18, 4
      %p276 = por %p274, %p275
      %p277 = scmp.ne.s32.totalorder %s269, %s272
      %p278 = scmp.eq.s32.totalorder %s18, 0
      %p279 = por %p277, %p278
      %p280 = scmp.ne.s32.totalorder %s269, %s272
      %p281 = scmp.eq.s32.totalorder %s23, 4
      %p282 = por %p280, %p281
      %p283 = scmp.ne.s32.totalorder %s272, %s273
      %p284 = scmp.eq.s32.totalorder %s23, 0
      %p285 = por %p283, %p284
      %p286 = scmp.ne.s32.totalorder %s272, %s273
      %p287 = scmp.eq.s32.totalorder %s24, 4
      %p288 = por %p286, %p287
      %p290 = scmp.ne.s32.totalorder %s273, %s289
      %p291 = scmp.eq.s32.totalorder %s24, 0
      %p292 = por %p290, %p291
      %p293 = scmp.le.s32.totalorder 1, %s18
      %p294 = scmp.lt.s32.totalorder %s18, 6
      %p295 = pnand %p293, %p294
      %p296 = pneg %p295
      // Predicated region
      $region9: #{tpu_custom_call.1} parent=5 // pred_check
        _
      $region10: #{tpu_custom_call.1} parent=5 // pred_check_branch
        %298 = sbr.rel (%p295) target = $region12
      $region11: #{tpu_custom_call.1} parent=5 // pred_region
        %s299 = ssub.s32 %s18, 1
        // Predicated region
        $region13: #{tpu_custom_call.1} parent=11 // pred_check
          %p300 = pneg %p91
        $region14: #{tpu_custom_call.1} parent=11 // pred_check_branch
          %302 = sbr.rel (%p300) target = $region16
        $region15: #{tpu_custom_call.1} parent=11 // pred_region
          _
        $region16: #{tpu_custom_call.1} parent=11 // pred_fallthru
          _
        // Predicated region
        $region17: #{tpu_custom_call.1} parent=11 // pred_check
          %p303 = pneg %p112
        $region18: #{tpu_custom_call.1} parent=11 // pred_check_branch
          %305 = sbr.rel (%p303) target = $region20
        $region19: #{tpu_custom_call.1} parent=11 // pred_region
          _
        $region20: #{tpu_custom_call.1} parent=11 // pred_fallthru
          _
        // Predicated region
        $region21: #{tpu_custom_call.1} parent=11 // pred_check
          %p306 = pneg %p133
        $region22: #{tpu_custom_call.1} parent=11 // pred_check_branch
          %308 = sbr.rel (%p306) target = $region24
        $region23: #{tpu_custom_call.1} parent=11 // pred_region
          _
        $region24: #{tpu_custom_call.1} parent=11 // pred_fallthru
          _
        // Predicated region
        $region25: #{tpu_custom_call.1} parent=11 // pred_check
          %p309 = pneg %p154
        $region26: #{tpu_custom_call.1} parent=11 // pred_check_branch
          %311 = sbr.rel (%p309) target = $region28
        $region27: #{tpu_custom_call.1} parent=11 // pred_region
          %s313 = ssub.s32 10240, 10240
          %314 = vsyncadd [#allocation3], %s313
          %s315 = sshll.u32 [#allocation2], 4
          %s316 = int_to_ptr.vmem [resolvable:$true] %s315
          %321 = dma.hbm_to_vmem [thread:$0]  %s5, 10240, %s316, [#allocation3], 128, 128, 8
        $region28: #{tpu_custom_call.1} parent=11 // pred_fallthru
          _
        // Predicated region
        $region29: #{tpu_custom_call.1} parent=11 // pred_check
          %p322 = pneg %p175
        $region30: #{tpu_custom_call.1} parent=11 // pred_check_branch
          %324 = sbr.rel (%p322) target = $region32
        $region31: #{tpu_custom_call.1} parent=11 // pred_region
          _
        $region32: #{tpu_custom_call.1} parent=11 // pred_fallthru
          _
        // Predicated region
        $region33: #{tpu_custom_call.1} parent=11 // pred_check
          %p325 = pneg %p196
        $region34: #{tpu_custom_call.1} parent=11 // pred_check_branch
          %327 = sbr.rel (%p325) target = $region36
        $region35: #{tpu_custom_call.1} parent=11 // pred_region
          _
        $region36: #{tpu_custom_call.1} parent=11 // pred_fallthru
          _
        // Predicated region
        $region37: #{tpu_custom_call.1} parent=11 // pred_check
          %p328 = pneg %p217
        $region38: #{tpu_custom_call.1} parent=11 // pred_check_branch
          %330 = sbr.rel (%p328) target = $region40
        $region39: #{tpu_custom_call.1} parent=11 // pred_region
          _
        $region40: #{tpu_custom_call.1} parent=11 // pred_fallthru
          _
        // Predicated region
        $region41: #{tpu_custom_call.1} parent=11 // pred_check
          %p331 = pneg %p238
        $region42: #{tpu_custom_call.1} parent=11 // pred_check_branch
          %333 = sbr.rel (%p331) target = $region44
        $region43: #{tpu_custom_call.1} parent=11 // pred_region
          _
        $region44: #{tpu_custom_call.1} parent=11 // pred_fallthru
          _
        // Predicated region
        $region45: #{tpu_custom_call.1} parent=11 // pred_check
          %p334 = pneg %p259
        $region46: #{tpu_custom_call.1} parent=11 // pred_check_branch
          %336 = sbr.rel (%p334) target = $region48
        $region47: #{tpu_custom_call.1} parent=11 // pred_region
          _
        $region48: #{tpu_custom_call.1} parent=11 // pred_fallthru
          _
      $region12: #{tpu_custom_call.1} parent=5 // pred_fallthru
        _
      %p337 = scmp.lt.s32.totalorder %s18, 5
      // Predicated region
      $region49: #{tpu_custom_call.1} parent=5 // pred_check
        %p338 = pneg %p337
      $region50: #{tpu_custom_call.1} parent=5 // pred_check_branch
        %340 = sbr.rel (%p338) target = $region52
      $region51: #{tpu_custom_call.1} parent=5 // pred_region
        // Predicated region
        $region53: #{tpu_custom_call.1} parent=51 // pred_check
          %p341 = pneg %p38
        $region54: #{tpu_custom_call.1} parent=51 // pred_check_branch
          %343 = sbr.rel (%p341) target = $region56
        $region55: #{tpu_custom_call.1} parent=51 // pred_region
          %p344 = scmp.lt.s32.totalorder %s18, 4
          %s345 = scalar_select %p344, %s18, 4
          %s346 = smul.addr %s345, 5
          %s347 = smul.addr %s346, 8
          %s348 = scalar_lea.vmem %s0, %s347
        $region56: #{tpu_custom_call.1} parent=51 // pred_fallthru
          _
        // Predicated region
        $region57: #{tpu_custom_call.1} parent=51 // pred_check
          %p349 = pneg %p64
        $region58: #{tpu_custom_call.1} parent=51 // pred_check_branch
          %351 = sbr.rel (%p349) target = $region60
        $region59: #{tpu_custom_call.1} parent=51 // pred_region
          %p352 = scmp.lt.s32.totalorder %s18, 4
          %s353 = scalar_select %p352, %s18, 4
          %s354 = smul.addr %s353, 8
          %s355 = scalar_lea.vmem %s1, %s354
        $region60: #{tpu_custom_call.1} parent=51 // pred_fallthru
          _
      $region52: #{tpu_custom_call.1} parent=5 // pred_fallthru
        _
      %p356 = scmp.le.s32.totalorder 1, %s18
      %p357 = scmp.lt.s32.totalorder %s18, 6
      %p358 = pnand %p356, %p357
      %p359 = pneg %p358
      // Predicated region
      $region61: #{tpu_custom_call.1} parent=5 // pred_check
        _
      $region62: #{tpu_custom_call.1} parent=5 // pred_check_branch
        %361 = sbr.rel (%p358) target = $region64
      $region63: #{tpu_custom_call.1} parent=5 // pred_region
        %s362 = ssub.s32 %s18, 1
        // Predicated region
        $region65: #{tpu_custom_call.1} parent=63 // pred_check
          %p363 = pneg %p154
        $region66: #{tpu_custom_call.1} parent=63 // pred_check_branch
          %365 = sbr.rel (%p363) target = $region68
        $region67: #{tpu_custom_call.1} parent=63 // pred_region
          %366 = dma.done [#allocation3], 10240
        $region68: #{tpu_custom_call.1} parent=63 // pred_fallthru
          _
        %p367 = scmp.lt.s32.totalorder %s23, 4
        %s368 = scalar_select %p367, %s23, 4
        %s369 = smul.addr %s368, 5
        %s370 = smul.addr %s369, 8
        %s371 = scalar_lea.vmem %s0, %s370
        %p372 = pneg %p44
        %p373 = pneg %p41
        %p374 = scmp.lt.s32.totalorder %s23, 4
        %s375 = scalar_select %p374, %s23, 4
        %s376 = smul.addr %s375, 8
        %s377 = scalar_lea.vmem %s1, %s376
        %p378 = pneg %p70
        %p379 = pneg %p67
        %p380 = pneg %p91
        %p381 = pneg %p88
        %p382 = pneg %p112
        %p383 = pneg %p109
        %p384 = pneg %p133
        %p385 = pneg %p130
        %p386 = pneg %p154
        %p387 = pneg %p151
        %p388 = pneg %p175
        %p389 = pneg %p172
        %p390 = pneg %p196
        %p391 = pneg %p193
        %p392 = pneg %p217
        %p393 = pneg %p214
        %p394 = pneg %p238
        %p395 = pneg %p235
        %p396 = pneg %p259
        %p397 = pneg %p256
        %p398 = pneg %p285
        %p399 = pneg %p282
        %p400 = scmp.lt.s32.totalorder %s23, 4
        %s401 = scalar_select %p400, %s23, 4
        %s402 = smul.addr %s401, 8
        %s403 = scalar_lea.vmem %s11, %s402
        %p404 = scmp.lt.s32.totalorder %s23, 4
        %s405 = scalar_select %p404, %s23, 4
        %s406 = smul.addr %s405, 5
        %s407 = smul.addr %s406, 8
        %s408 = scalar_lea.vmem %s0, %s407
        %p409 = scmp.lt.s32.totalorder %s23, 4
        %s410 = scalar_select %p409, %s23, 4
        %s411 = smul.addr %s410, 8
        %s412 = scalar_lea.vmem %s1, %s411
        %p413 = scmp.lt.s32.totalorder %s23, 4
        %s414 = scalar_select %p413, %s23, 4
        %s415 = smul.addr %s414, 8
        %s416 = scalar_lea.vmem %s11, %s415
        %v417 = vld [vmem:[%s412] sm:$0xff]
        %v418 = vld [vmem:[%s2] sm:$0x7]
        %420 = vset.pattern.permute.xlu0 0
        %421 = vperm.xlu0 %420, %v417
        %v422 = vpop.permute.xlu0 %421
        %v424 = vlaneseq
        %v425 = vshrl.u32 %v424, 7
        %v426 = vsub.s32 0, %v425
        %v427 = vrot.slane %v418, %v426
        %v428 = vmul.f32 %v422, %v427
        %429 = vset.pattern.permute.xlu0 1
        %430 = vperm.xlu0 %429, %v417
        %v431 = vpop.permute.xlu0 %430
        %v433 = vlaneseq
        %v434 = vshrl.u32 %v433, 7
        %v435 = vsub.s32 1, %v434
        %v436 = vrot.slane %v418, %v435
        %v437 = vmul.f32 %v431, %v436
        %v438 = vadd.f32 %v428, %v437
        %439 = vset.pattern.permute.xlu0 2
        %440 = vperm.xlu0 %439, %v417
        %v441 = vpop.permute.xlu0 %440
        %v443 = vlaneseq
        %v444 = vshrl.u32 %v443, 7
        %v445 = vsub.s32 2, %v444
        %v446 = vrot.slane %v418, %v445
        %v447 = vmul.f32 %v441, %v446
        %v448 = vadd.f32 %v438, %v447
        %v449 = vld [vmem:[%s3] sm:$0x1]
        %v451 = vlaneseq
        %v452 = vshrl.u32 %v451, 7
        %v453 = vsub.s32 0, %v452
        %v454 = vrot.slane %v449, %v453
        %v456 = vadd.f32 %v448, %v454
        %v457 = vmax.f32 %v456, 0.0
        %v458 = vld [vmem:[%s408] sm:$0xff]
        %v459 = vld [vmem:[%s408 + $0x8] sm:$0xff]
        %v460 = vld [vmem:[%s408 + $0x10] sm:$0xff]
        %v461 = vld [vmem:[%s408 + $0x18] sm:$0xff]
        %v462 = vld [vmem:[%s408 + $0x20] sm:$0xff]
        %v463 = vld [vmem:[#allocation2] sm:$0xff]
        %v464 = vld [vmem:[#allocation2 + $0x8] sm:$0xff]
        %v465 = vld [vmem:[#allocation2 + $0x10] sm:$0xff]
        %v466 = vld [vmem:[#allocation2 + $0x18] sm:$0xff]
        %v467 = vld [vmem:[#allocation2 + $0x20] sm:$0xff]
        %v468 = vld [vmem:[#allocation2 + $0x28] sm:$0xff]
        %v469 = vld [vmem:[#allocation2 + $0x30] sm:$0xff]
        %v470 = vld [vmem:[#allocation2 + $0x38] sm:$0xff]
        %v471 = vld [vmem:[#allocation2 + $0x40] sm:$0xff]
        %v472 = vld [vmem:[#allocation2 + $0x48] sm:$0xff]
        %v473 = vld [vmem:[#allocation2 + $0x50] sm:$0xff]
        %v474 = vld [vmem:[#allocation2 + $0x58] sm:$0xff]
        %v475 = vld [vmem:[#allocation2 + $0x60] sm:$0xff]
        %v476 = vld [vmem:[#allocation2 + $0x68] sm:$0xff]
        %v477 = vld [vmem:[#allocation2 + $0x70] sm:$0xff]
        %v478 = vld [vmem:[#allocation2 + $0x78] sm:$0xff]
        %v479 = vld [vmem:[#allocation2 + $0x80] sm:$0xff]
        %v480 = vld [vmem:[#allocation2 + $0x88] sm:$0xff]
        %v481 = vld [vmem:[#allocation2 + $0x90] sm:$0xff]
        %v482 = vld [vmem:[#allocation2 + $0x98] sm:$0xff]
        %v483 = vld [vmem:[#allocation2 + $0xa0] sm:$0xff]
        %v484 = vld [vmem:[#allocation2 + $0xa8] sm:$0xff]
        %v485 = vld [vmem:[#allocation2 + $0xb0] sm:$0xff]
        %v486 = vld [vmem:[#allocation2 + $0xb8] sm:$0xff]
        %v487 = vld [vmem:[#allocation2 + $0xc0] sm:$0xff]
        %v488 = vld [vmem:[#allocation2 + $0xc8] sm:$0xff]
        %v489 = vld [vmem:[#allocation2 + $0xd0] sm:$0xff]
        %v490 = vld [vmem:[#allocation2 + $0xd8] sm:$0xff]
        %v491 = vld [vmem:[#allocation2 + $0xe0] sm:$0xff]
        %v492 = vld [vmem:[#allocation2 + $0xe8] sm:$0xff]
        %v493 = vld [vmem:[#allocation2 + $0xf0] sm:$0xff]
        %v494 = vld [vmem:[#allocation2 + $0xf8] sm:$0xff]
        %v495 = vld [vmem:[#allocation2 + $0x100] sm:$0xff]
        %v496 = vld [vmem:[#allocation2 + $0x108] sm:$0xff]
        %v497 = vld [vmem:[#allocation2 + $0x110] sm:$0xff]
        %v498 = vld [vmem:[#allocation2 + $0x118] sm:$0xff]
        %v499 = vld [vmem:[#allocation2 + $0x120] sm:$0xff]
        %v500 = vld [vmem:[#allocation2 + $0x128] sm:$0xff]
        %v501 = vld [vmem:[#allocation2 + $0x130] sm:$0xff]
        %v502 = vld [vmem:[#allocation2 + $0x138] sm:$0xff]
        %v503 = vld [vmem:[#allocation2 + $0x140] sm:$0xff]
        %v504 = vld [vmem:[#allocation2 + $0x148] sm:$0xff]
        %v505 = vld [vmem:[#allocation2 + $0x150] sm:$0xff]
        %v506 = vld [vmem:[#allocation2 + $0x158] sm:$0xff]
        %v507 = vld [vmem:[#allocation2 + $0x160] sm:$0xff]
        %v508 = vld [vmem:[#allocation2 + $0x168] sm:$0xff]
        %v509 = vld [vmem:[#allocation2 + $0x170] sm:$0xff]
        %v510 = vld [vmem:[#allocation2 + $0x178] sm:$0xff]
        %v511 = vld [vmem:[#allocation2 + $0x180] sm:$0xff]
        %v512 = vld [vmem:[#allocation2 + $0x188] sm:$0xff]
        %v513 = vld [vmem:[#allocation2 + $0x190] sm:$0xff]
        %v514 = vld [vmem:[#allocation2 + $0x198] sm:$0xff]
        %v515 = vld [vmem:[#allocation2 + $0x1a0] sm:$0xff]
        %v516 = vld [vmem:[#allocation2 + $0x1a8] sm:$0xff]
        %v517 = vld [vmem:[#allocation2 + $0x1b0] sm:$0xff]
        %v518 = vld [vmem:[#allocation2 + $0x1b8] sm:$0xff]
        %v519 = vld [vmem:[#allocation2 + $0x1c0] sm:$0xff]
        %v520 = vld [vmem:[#allocation2 + $0x1c8] sm:$0xff]
        %v521 = vld [vmem:[#allocation2 + $0x1d0] sm:$0xff]
        %v522 = vld [vmem:[#allocation2 + $0x1d8] sm:$0xff]
        %v523 = vld [vmem:[#allocation2 + $0x1e0] sm:$0xff]
        %v524 = vld [vmem:[#allocation2 + $0x1e8] sm:$0xff]
        %v525 = vld [vmem:[#allocation2 + $0x1f0] sm:$0xff]
        %v526 = vld [vmem:[#allocation2 + $0x1f8] sm:$0xff]
        %v527 = vld [vmem:[#allocation2 + $0x200] sm:$0xff]
        %v528 = vld [vmem:[#allocation2 + $0x208] sm:$0xff]
        %v529 = vld [vmem:[#allocation2 + $0x210] sm:$0xff]
        %v530 = vld [vmem:[#allocation2 + $0x218] sm:$0xff]
        %v531 = vld [vmem:[#allocation2 + $0x220] sm:$0xff]
        %v532 = vld [vmem:[#allocation2 + $0x228] sm:$0xff]
        %v533 = vld [vmem:[#allocation2 + $0x230] sm:$0xff]
        %v534 = vld [vmem:[#allocation2 + $0x238] sm:$0xff]
        %v535 = vld [vmem:[#allocation2 + $0x240] sm:$0xff]
        %v536 = vld [vmem:[#allocation2 + $0x248] sm:$0xff]
        %v537 = vld [vmem:[#allocation2 + $0x250] sm:$0xff]
        %v538 = vld [vmem:[#allocation2 + $0x258] sm:$0xff]
        %v539 = vld [vmem:[#allocation2 + $0x260] sm:$0xff]
        %v540 = vld [vmem:[#allocation2 + $0x268] sm:$0xff]
        %v541 = vld [vmem:[#allocation2 + $0x270] sm:$0xff]
        %v542 = vld [vmem:[#allocation2 + $0x278] sm:$0xff]
        %v543 = vld [vmem:[%s4] sm:$0xff]
        %v544 = vld [vmem:[%s4 + $0x8] sm:$0xff]
        %v545 = vld [vmem:[%s4 + $0x10] sm:$0xff]
        %v546 = vld [vmem:[%s4 + $0x18] sm:$0xff]
        %vm547 = vcmask 261120
        %v549 = vsel %vm547, %v457, 0
        %551 = vmatprep.subr.mxu0 0.0
        %552 = vmatpush1.msra.mxu0 %v543
        %553 = vmatprep.subr.mxu0 0.0
        %554 = vmatpush1.msra.mxu0 %v544
        %555 = vmatprep.subr.mxu0 0.0
        %556 = vmatpush1.msra.mxu0 %v545
        %557 = vmatprep.subr.mxu0 0.0
        %558 = vmatpush1.msra.mxu0 %v546
        %559 = vmatprep.subr.mxu0 0.0
        %560 = vmatpush1.msra.mxu0 0.0
        %561 = vmatprep.subr.mxu0 0.0
        %562 = vmatpush1.msra.mxu0 0.0
        %563 = vmatprep.subr.mxu0 0.0
        %564 = vmatpush1.msra.mxu0 0.0
        %565 = vmatprep.subr.mxu0 0.0
        %566 = vmatpush1.msra.mxu0 0.0
        %567 = vmatprep.subr.mxu0 0.0
        %568 = vmatpush1.msra.mxu0 0.0
        %569 = vmatprep.subr.mxu0 0.0
        %570 = vmatpush1.msra.mxu0 0.0
        %571 = vmatprep.subr.mxu0 0.0
        %572 = vmatpush1.msra.mxu0 0.0
        %573 = vmatprep.subr.mxu0 0.0
        %574 = vmatpush1.msra.mxu0 0.0
        %575 = vmatprep.subr.mxu0 0.0
        %576 = vmatpush1.msra.mxu0 0.0
        %577 = vmatprep.subr.mxu0 0.0
        %578 = vmatpush1.msra.mxu0 0.0
        %579 = vmatprep.subr.mxu0 0.0
        %580 = vmatpush1.msra.mxu0 0.0
        %581 = vmatprep.subr.mxu0 0.0
        %582 = vmatpush1.msra.mxu0 0.0
        %583 = vmatprep.subr.mxu0 0.0
        %584 = vmatpush1.msra.mxu0 0.0
        %585 = vmatprep.subr.mxu0 0.0
        %586 = vmatpush1.msra.mxu0 0.0
        %587 = vmatprep.subr.mxu0 0.0
        %588 = vmatpush1.msra.mxu0 0.0
        %589 = vmatprep.subr.mxu0 0.0
        %590 = vmatpush1.msra.mxu0 0.0
        %591 = vmatprep.subr.mxu0 0.0
        %592 = vmatpush1.msra.mxu0 0.0
        %593 = vmatprep.subr.mxu0 0.0
        %594 = vmatpush1.msra.mxu0 0.0
        %595 = vmatprep.subr.mxu0 0.0
        %596 = vmatpush1.msra.mxu0 0.0
        %597 = vmatprep.subr.mxu0 0.0
        %598 = vmatpush1.msra.mxu0 0.0
        %599 = vmatprep.subr.mxu0 0.0
        %600 = vmatpush1.msra.mxu0 0.0
        %601 = vmatprep.subr.mxu0 0.0
        %602 = vmatpush1.msra.mxu0 0.0
        %603 = vmatprep.subr.mxu0 0.0
        %604 = vmatpush1.msra.mxu0 0.0
        %605 = vmatprep.subr.mxu0 0.0
        %606 = vmatpush1.msra.mxu0 0.0
        %607 = vmatprep.subr.mxu0 0.0
        %608 = vmatpush1.msra.mxu0 0.0
        %609 = vmatprep.subr.mxu0 0.0
        %610 = vmatpush1.msra.mxu0 0.0
        %611 = vmatprep.subr.mxu0 0.0
        %612 = vmatpush1.msra.mxu0 0.0
        %613 = vmatprep.subr.mxu0 0.0
        %614 = vmatpush1.msra.mxu0 0.0
        %615 = vmatprep.mubr.f32.mxu0 0.0
        %616 = vmatmul.mubr.f32.gmra.mrb[0].mxu0 %v549
        %v617 = vpop.f32.mrb[0].mxu0
        %v618 = vadd.f32 0.0, %v617
        %v619 = vpop.f32.mrb[0].mxu0
        %620 = vdwg.mxu0
        %621 = vmatprep.subr.mxu0 0.0
        %622 = vmatpush1.msra.mxu0 %v463
        %623 = vmatprep.subr.mxu0 0.0
        %624 = vmatpush1.msra.mxu0 %v464
        %625 = vmatprep.subr.mxu0 0.0
        %626 = vmatpush1.msra.mxu0 %v465
        %627 = vmatprep.subr.mxu0 0.0
        %628 = vmatpush1.msra.mxu0 %v466
        %629 = vmatprep.subr.mxu0 0.0
        %630 = vmatpush1.msra.mxu0 %v467
        %631 = vmatprep.subr.mxu0 0.0
        %632 = vmatpush1.msra.mxu0 %v468
        %633 = vmatprep.subr.mxu0 0.0
        %634 = vmatpush1.msra.mxu0 %v469
        %635 = vmatprep.subr.mxu0 0.0
        %636 = vmatpush1.msra.mxu0 %v470
        %637 = vmatprep.subr.mxu0 0.0
        %638 = vmatpush1.msra.mxu0 %v471
        %639 = vmatprep.subr.mxu0 0.0
        %640 = vmatpush1.msra.mxu0 %v472
        %641 = vmatprep.subr.mxu0 0.0
        %642 = vmatpush1.msra.mxu0 %v473
        %643 = vmatprep.subr.mxu0 0.0
        %644 = vmatpush1.msra.mxu0 %v474
        %645 = vmatprep.subr.mxu0 0.0
        %646 = vmatpush1.msra.mxu0 %v475
        %647 = vmatprep.subr.mxu0 0.0
        %648 = vmatpush1.msra.mxu0 %v476
        %649 = vmatprep.subr.mxu0 0.0
        %650 = vmatpush1.msra.mxu0 %v477
        %651 = vmatprep.subr.mxu0 0.0
        %652 = vmatpush1.msra.mxu0 %v478
        %653 = vmatprep.subr.mxu0 0.0
        %654 = vmatpush1.msra.mxu0 %v479
        %655 = vmatprep.subr.mxu0 0.0
        %656 = vmatpush1.msra.mxu0 %v480
        %657 = vmatprep.subr.mxu0 0.0
        %658 = vmatpush1.msra.mxu0 %v481
        %659 = vmatprep.subr.mxu0 0.0
        %660 = vmatpush1.msra.mxu0 %v482
        %661 = vmatprep.subr.mxu0 0.0
        %662 = vmatpush1.msra.mxu0 %v483
        %663 = vmatprep.subr.mxu0 0.0
        %664 = vmatpush1.msra.mxu0 %v484
        %665 = vmatprep.subr.mxu0 0.0
        %666 = vmatpush1.msra.mxu0 %v485
        %667 = vmatprep.subr.mxu0 0.0
        %668 = vmatpush1.msra.mxu0 %v486
        %669 = vmatprep.subr.mxu0 0.0
        %670 = vmatpush1.msra.mxu0 %v487
        %671 = vmatprep.subr.mxu0 0.0
        %672 = vmatpush1.msra.mxu0 %v488
        %673 = vmatprep.subr.mxu0 0.0
        %674 = vmatpush1.msra.mxu0 %v489
        %675 = vmatprep.subr.mxu0 0.0
        %676 = vmatpush1.msra.mxu0 %v490
        %677 = vmatprep.subr.mxu0 0.0
        %678 = vmatpush1.msra.mxu0 %v491
        %679 = vmatprep.subr.mxu0 0.0
        %680 = vmatpush1.msra.mxu0 %v492
        %681 = vmatprep.subr.mxu0 0.0
        %682 = vmatpush1.msra.mxu0 %v493
        %683 = vmatprep.subr.mxu0 0.0
        %684 = vmatpush1.msra.mxu0 %v494
        %685 = vmatprep.mubr.f32.mxu0 %v459
        %686 = vmatmul.mubr.f32.gmra.mrb[0].mxu0 %v458
        %v687 = vpop.f32.mrb[0].mxu0
        %v688 = vadd.f32 %v618, %v687
        %v689 = vpop.f32.mrb[0].mxu0
        %690 = vdwg.mxu0
        %691 = vmatprep.subr.mxu0 0.0
        %692 = vmatpush1.msra.mxu0 %v495
        %693 = vmatprep.subr.mxu0 0.0
        %694 = vmatpush1.msra.mxu0 %v496
        %695 = vmatprep.subr.mxu0 0.0
        %696 = vmatpush1.msra.mxu0 %v497
        %697 = vmatprep.subr.mxu0 0.0
        %698 = vmatpush1.msra.mxu0 %v498
        %699 = vmatprep.subr.mxu0 0.0
        %700 = vmatpush1.msra.mxu0 %v499
        %701 = vmatprep.subr.mxu0 0.0
        %702 = vmatpush1.msra.mxu0 %v500
        %703 = vmatprep.subr.mxu0 0.0
        %704 = vmatpush1.msra.mxu0 %v501
        %705 = vmatprep.subr.mxu0 0.0
        %706 = vmatpush1.msra.mxu0 %v502
        %707 = vmatprep.subr.mxu0 0.0
        %708 = vmatpush1.msra.mxu0 %v503
        %709 = vmatprep.subr.mxu0 0.0
        %710 = vmatpush1.msra.mxu0 %v504
        %711 = vmatprep.subr.mxu0 0.0
        %712 = vmatpush1.msra.mxu0 %v505
        %713 = vmatprep.subr.mxu0 0.0
        %714 = vmatpush1.msra.mxu0 %v506
        %715 = vmatprep.subr.mxu0 0.0
        %716 = vmatpush1.msra.mxu0 %v507
        %717 = vmatprep.subr.mxu0 0.0
        %718 = vmatpush1.msra.mxu0 %v508
        %719 = vmatprep.subr.mxu0 0.0
        %720 = vmatpush1.msra.mxu0 %v509
        %721 = vmatprep.subr.mxu0 0.0
        %722 = vmatpush1.msra.mxu0 %v510
        %723 = vmatprep.subr.mxu0 0.0
        %724 = vmatpush1.msra.mxu0 %v511
        %725 = vmatprep.subr.mxu0 0.0
        %726 = vmatpush1.msra.mxu0 %v512
        %727 = vmatprep.subr.mxu0 0.0
        %728 = vmatpush1.msra.mxu0 %v513
        %729 = vmatprep.subr.mxu0 0.0
        %730 = vmatpush1.msra.mxu0 %v514
        %731 = vmatprep.subr.mxu0 0.0
        %732 = vmatpush1.msra.mxu0 %v515
        %733 = vmatprep.subr.mxu0 0.0
        %734 = vmatpush1.msra.mxu0 %v516
        %735 = vmatprep.subr.mxu0 0.0
        %736 = vmatpush1.msra.mxu0 %v517
        %737 = vmatprep.subr.mxu0 0.0
        %738 = vmatpush1.msra.mxu0 %v518
        %739 = vmatprep.subr.mxu0 0.0
        %740 = vmatpush1.msra.mxu0 %v519
        %741 = vmatprep.subr.mxu0 0.0
        %742 = vmatpush1.msra.mxu0 %v520
        %743 = vmatprep.subr.mxu0 0.0
        %744 = vmatpush1.msra.mxu0 %v521
        %745 = vmatprep.subr.mxu0 0.0
        %746 = vmatpush1.msra.mxu0 %v522
        %747 = vmatprep.subr.mxu0 0.0
        %748 = vmatpush1.msra.mxu0 %v523
        %749 = vmatprep.subr.mxu0 0.0
        %750 = vmatpush1.msra.mxu0 %v524
        %751 = vmatprep.subr.mxu0 0.0
        %752 = vmatpush1.msra.mxu0 %v525
        %753 = vmatprep.subr.mxu0 0.0
        %754 = vmatpush1.msra.mxu0 %v526
        %755 = vmatprep.mubr.f32.mxu0 %v461
        %756 = vmatmul.mubr.f32.gmra.mrb[0].mxu0 %v460
        %v757 = vpop.f32.mrb[0].mxu0
        %v758 = vadd.f32 %v688, %v757
        %v759 = vpop.f32.mrb[0].mxu0
        %760 = vdwg.mxu0
        %761 = vmatprep.subr.mxu0 0.0
        %762 = vmatpush1.msra.mxu0 %v527
        %763 = vmatprep.subr.mxu0 0.0
        %764 = vmatpush1.msra.mxu0 %v528
        %765 = vmatprep.subr.mxu0 0.0
        %766 = vmatpush1.msra.mxu0 %v529
        %767 = vmatprep.subr.mxu0 0.0
        %768 = vmatpush1.msra.mxu0 %v530
        %769 = vmatprep.subr.mxu0 0.0
        %770 = vmatpush1.msra.mxu0 %v531
        %771 = vmatprep.subr.mxu0 0.0
        %772 = vmatpush1.msra.mxu0 %v532
        %773 = vmatprep.subr.mxu0 0.0
        %774 = vmatpush1.msra.mxu0 %v533
        %775 = vmatprep.subr.mxu0 0.0
        %776 = vmatpush1.msra.mxu0 %v534
        %777 = vmatprep.subr.mxu0 0.0
        %778 = vmatpush1.msra.mxu0 %v535
        %779 = vmatprep.subr.mxu0 0.0
        %780 = vmatpush1.msra.mxu0 %v536
        %781 = vmatprep.subr.mxu0 0.0
        %782 = vmatpush1.msra.mxu0 %v537
        %783 = vmatprep.subr.mxu0 0.0
        %784 = vmatpush1.msra.mxu0 %v538
        %785 = vmatprep.subr.mxu0 0.0
        %786 = vmatpush1.msra.mxu0 %v539
        %787 = vmatprep.subr.mxu0 0.0
        %788 = vmatpush1.msra.mxu0 %v540
        %789 = vmatprep.subr.mxu0 0.0
        %790 = vmatpush1.msra.mxu0 %v541
        %791 = vmatprep.subr.mxu0 0.0
        %792 = vmatpush1.msra.mxu0 %v542
        %793 = vmatprep.subr.mxu0 0.0
        %794 = vmatpush1.msra.mxu0 0.0
        %795 = vmatprep.subr.mxu0 0.0
        %796 = vmatpush1.msra.mxu0 0.0
        %797 = vmatprep.subr.mxu0 0.0
        %798 = vmatpush1.msra.mxu0 0.0
        %799 = vmatprep.subr.mxu0 0.0
        %800 = vmatpush1.msra.mxu0 0.0
        %801 = vmatprep.subr.mxu0 0.0
        %802 = vmatpush1.msra.mxu0 0.0
        %803 = vmatprep.subr.mxu0 0.0
        %804 = vmatpush1.msra.mxu0 0.0
        %805 = vmatprep.subr.mxu0 0.0
        %806 = vmatpush1.msra.mxu0 0.0
        %807 = vmatprep.subr.mxu0 0.0
        %808 = vmatpush1.msra.mxu0 0.0
        %809 = vmatprep.subr.mxu0 0.0
        %810 = vmatpush1.msra.mxu0 0.0
        %811 = vmatprep.subr.mxu0 0.0
        %812 = vmatpush1.msra.mxu0 0.0
        %813 = vmatprep.subr.mxu0 0.0
        %814 = vmatpush1.msra.mxu0 0.0
        %815 = vmatprep.subr.mxu0 0.0
        %816 = vmatpush1.msra.mxu0 0.0
        %817 = vmatprep.subr.mxu0 0.0
        %818 = vmatpush1.msra.mxu0 0.0
        %819 = vmatprep.subr.mxu0 0.0
        %820 = vmatpush1.msra.mxu0 0.0
        %821 = vmatprep.subr.mxu0 0.0
        %822 = vmatpush1.msra.mxu0 0.0
        %823 = vmatprep.subr.mxu0 0.0
        %824 = vmatpush1.msra.mxu0 0.0
        %825 = vmatprep.mubr.f32.mxu0 0.0
        %826 = vmatmul.mubr.f32.gmra.mrb[0].mxu0 %v462
        %v827 = vpop.f32.mrb[0].mxu0
        %v828 = vadd.f32 %v758, %v827
        %v829 = vpop.f32.mrb[0].mxu0
        %830 = vdwg.mxu0
        %v831 = vld [vmem:[%s6] sm:$0x1]
        %v833 = vlaneseq
        %v834 = vshrl.u32 %v833, 7
        %v835 = vsub.s32 0, %v834
        %v836 = vrot.slane %v831, %v835
        %v838 = vadd.f32 %v828, %v836
        %v839 = vmax.f32 %v838, 0.0
        %v840 = vld [vmem:[%s7] sm:$0xff]
        %v841 = vld [vmem:[%s7 + $0x8] sm:$0xff]
        %v842 = vld [vmem:[%s7 + $0x10] sm:$0xff]
        %v843 = vld [vmem:[%s7 + $0x18] sm:$0xff]
        %v844 = vld [vmem:[%s7 + $0x20] sm:$0xff]
        %v845 = vld [vmem:[%s7 + $0x28] sm:$0xff]
        %v846 = vld [vmem:[%s7 + $0x30] sm:$0xff]
        %v847 = vld [vmem:[%s7 + $0x38] sm:$0xff]
        %v848 = vld [vmem:[%s7 + $0x40] sm:$0xff]
        %v849 = vld [vmem:[%s7 + $0x48] sm:$0xff]
        %v850 = vld [vmem:[%s7 + $0x50] sm:$0xff]
        %v851 = vld [vmem:[%s7 + $0x58] sm:$0xff]
        %v852 = vld [vmem:[%s7 + $0x60] sm:$0xff]
        %v853 = vld [vmem:[%s7 + $0x68] sm:$0xff]
        %v854 = vld [vmem:[%s7 + $0x70] sm:$0xff]
        %v855 = vld [vmem:[%s7 + $0x78] sm:$0xff]
        %v856 = vld [vmem:[%s8] sm:$0x1]
        %v858 = vlaneseq
        %v859 = vshrl.u32 %v858, 7
        %v860 = vsub.s32 0, %v859
        %v861 = vrot.slane %v856, %v860
        %863 = vmatprep.subr.mxu0 0.0
        %864 = vmatpush1.msra.mxu0 %v840
        %865 = vmatprep.subr.mxu0 0.0
        %866 = vmatpush1.msra.mxu0 %v841
        %867 = vmatprep.subr.mxu0 0.0
        %868 = vmatpush1.msra.mxu0 %v842
        %869 = vmatprep.subr.mxu0 0.0
        %870 = vmatpush1.msra.mxu0 %v843
        %871 = vmatprep.subr.mxu0 0.0
        %872 = vmatpush1.msra.mxu0 %v844
        %873 = vmatprep.subr.mxu0 0.0
        %874 = vmatpush1.msra.mxu0 %v845
        %875 = vmatprep.subr.mxu0 0.0
        %876 = vmatpush1.msra.mxu0 %v846
        %877 = vmatprep.subr.mxu0 0.0
        %878 = vmatpush1.msra.mxu0 %v847
        %879 = vmatprep.subr.mxu0 0.0
        %880 = vmatpush1.msra.mxu0 %v848
        %881 = vmatprep.subr.mxu0 0.0
        %882 = vmatpush1.msra.mxu0 %v849
        %883 = vmatprep.subr.mxu0 0.0
        %884 = vmatpush1.msra.mxu0 %v850
        %885 = vmatprep.subr.mxu0 0.0
        %886 = vmatpush1.msra.mxu0 %v851
        %887 = vmatprep.subr.mxu0 0.0
        %888 = vmatpush1.msra.mxu0 %v852
        %889 = vmatprep.subr.mxu0 0.0
        %890 = vmatpush1.msra.mxu0 %v853
        %891 = vmatprep.subr.mxu0 0.0
        %892 = vmatpush1.msra.mxu0 %v854
        %893 = vmatprep.subr.mxu0 0.0
        %894 = vmatpush1.msra.mxu0 %v855
        %895 = vmatprep.subr.mxu0 0.0
        %896 = vmatpush1.msra.mxu0 0.0
        %897 = vmatprep.subr.mxu0 0.0
        %898 = vmatpush1.msra.mxu0 0.0
        %899 = vmatprep.subr.mxu0 0.0
        %900 = vmatpush1.msra.mxu0 0.0
        %901 = vmatprep.subr.mxu0 0.0
        %902 = vmatpush1.msra.mxu0 0.0
        %903 = vmatprep.subr.mxu0 0.0
        %904 = vmatpush1.msra.mxu0 0.0
        %905 = vmatprep.subr.mxu0 0.0
        %906 = vmatpush1.msra.mxu0 0.0
        %907 = vmatprep.subr.mxu0 0.0
        %908 = vmatpush1.msra.mxu0 0.0
        %909 = vmatprep.subr.mxu0 0.0
        %910 = vmatpush1.msra.mxu0 0.0
        %911 = vmatprep.subr.mxu0 0.0
        %912 = vmatpush1.msra.mxu0 0.0
        %913 = vmatprep.subr.mxu0 0.0
        %914 = vmatpush1.msra.mxu0 0.0
        %915 = vmatprep.subr.mxu0 0.0
        %916 = vmatpush1.msra.mxu0 0.0
        %917 = vmatprep.subr.mxu0 0.0
        %918 = vmatpush1.msra.mxu0 0.0
        %919 = vmatprep.subr.mxu0 0.0
        %920 = vmatpush1.msra.mxu0 0.0
        %921 = vmatprep.subr.mxu0 0.0
        %922 = vmatpush1.msra.mxu0 0.0
        %923 = vmatprep.subr.mxu0 0.0
        %924 = vmatpush1.msra.mxu0 0.0
        %925 = vmatprep.subr.mxu0 0.0
        %926 = vmatpush1.msra.mxu0 0.0
        %927 = vmatprep.mubr.f32.mxu0 0.0
        %928 = vmatmul.mubr.f32.gmra.mrb[0].mxu0 %v839
        %v929 = vpop.f32.mrb[0].mxu0
        %v930 = vadd.f32 %v861, %v929
        %v931 = vpop.f32.mrb[0].mxu0
        %932 = vdwg.mxu0
        %v933 = vmax.f32 %v930, 0.0
        %v934 = vld [vmem:[%s9] sm:$0xff]
        %v935 = vld [vmem:[%s9 + $0x8] sm:$0xff]
        %v936 = vld [vmem:[%s9 + $0x10] sm:$0xff]
        %v937 = vld [vmem:[%s9 + $0x18] sm:$0xff]
        %v938 = vld [vmem:[%s9 + $0x20] sm:$0xff]
        %v939 = vld [vmem:[%s9 + $0x28] sm:$0xff]
        %v940 = vld [vmem:[%s9 + $0x30] sm:$0xff]
        %v941 = vld [vmem:[%s9 + $0x38] sm:$0xff]
        %v942 = vld [vmem:[%s10] sm:$0x1]
        %v944 = vlaneseq
        %v945 = vshrl.u32 %v944, 7
        %v946 = vsub.s32 0, %v945
        %v947 = vrot.slane %v942, %v946
        %vm949 = vcmask 523264
        %v951 = vsel %vm949, %v933, 0
        %953 = vmatprep.subr.mxu0 0.0
        %954 = vmatpush1.msra.mxu0 %v934
        %955 = vmatprep.subr.mxu0 0.0
        %956 = vmatpush1.msra.mxu0 %v935
        %957 = vmatprep.subr.mxu0 0.0
        %958 = vmatpush1.msra.mxu0 %v936
        %959 = vmatprep.subr.mxu0 0.0
        %960 = vmatpush1.msra.mxu0 %v937
        %961 = vmatprep.subr.mxu0 0.0
        %962 = vmatpush1.msra.mxu0 %v938
        %963 = vmatprep.subr.mxu0 0.0
        %964 = vmatpush1.msra.mxu0 %v939
        %965 = vmatprep.subr.mxu0 0.0
        %966 = vmatpush1.msra.mxu0 %v940
        %967 = vmatprep.subr.mxu0 0.0
        %968 = vmatpush1.msra.mxu0 %v941
        %969 = vmatprep.subr.mxu0 0.0
        %970 = vmatpush1.msra.mxu0 0.0
        %971 = vmatprep.subr.mxu0 0.0
        %972 = vmatpush1.msra.mxu0 0.0
        %973 = vmatprep.subr.mxu0 0.0
        %974 = vmatpush1.msra.mxu0 0.0
        %975 = vmatprep.subr.mxu0 0.0
        %976 = vmatpush1.msra.mxu0 0.0
        %977 = vmatprep.subr.mxu0 0.0
        %978 = vmatpush1.msra.mxu0 0.0
        %979 = vmatprep.subr.mxu0 0.0
        %980 = vmatpush1.msra.mxu0 0.0
        %981 = vmatprep.subr.mxu0 0.0
        %982 = vmatpush1.msra.mxu0 0.0
        %983 = vmatprep.subr.mxu0 0.0
        %984 = vmatpush1.msra.mxu0 0.0
        %985 = vmatprep.subr.mxu0 0.0
        %986 = vmatpush1.msra.mxu0 0.0
        %987 = vmatprep.subr.mxu0 0.0
        %988 = vmatpush1.msra.mxu0 0.0
        %989 = vmatprep.subr.mxu0 0.0
        %990 = vmatpush1.msra.mxu0 0.0
        %991 = vmatprep.subr.mxu0 0.0
        %992 = vmatpush1.msra.mxu0 0.0
        %993 = vmatprep.subr.mxu0 0.0
        %994 = vmatpush1.msra.mxu0 0.0
        %995 = vmatprep.subr.mxu0 0.0
        %996 = vmatpush1.msra.mxu0 0.0
        %997 = vmatprep.subr.mxu0 0.0
        %998 = vmatpush1.msra.mxu0 0.0
        %999 = vmatprep.subr.mxu0 0.0
        %1000 = vmatpush1.msra.mxu0 0.0
        %1001 = vmatprep.subr.mxu0 0.0
        %1002 = vmatpush1.msra.mxu0 0.0
        %1003 = vmatprep.subr.mxu0 0.0
        %1004 = vmatpush1.msra.mxu0 0.0
        %1005 = vmatprep.subr.mxu0 0.0
        %1006 = vmatpush1.msra.mxu0 0.0
        %1007 = vmatprep.subr.mxu0 0.0
        %1008 = vmatpush1.msra.mxu0 0.0
        %1009 = vmatprep.subr.mxu0 0.0
        %1010 = vmatpush1.msra.mxu0 0.0
        %1011 = vmatprep.subr.mxu0 0.0
        %1012 = vmatpush1.msra.mxu0 0.0
        %1013 = vmatprep.subr.mxu0 0.0
        %1014 = vmatpush1.msra.mxu0 0.0
        %1015 = vmatprep.subr.mxu0 0.0
        %1016 = vmatpush1.msra.mxu0 0.0
        %1017 = vmatprep.mubr.f32.mxu0 0.0
        %1018 = vmatmul.mubr.f32.gmra.mrb[0].mxu0 %v951
        %v1019 = vpop.f32.mrb[0].mxu0
        %v1020 = vadd.f32 %v947, %v1019
        %v1021 = vpop.f32.mrb[0].mxu0
        %1022 = vdwg.mxu0
        %vm1023 = vcmask 130048
        %1024 = vst.msk [vmem:[%s416] sm:$0xff] %vm1023, %v1020
        %p1025 = scmp.lt.s32.totalorder %s23, 4
        %s1026 = scalar_select %p1025, %s23, 4
        %s1027 = smul.addr %s1026, 8
        %s1028 = scalar_lea.vmem %s11, %s1027
        // Predicated region
        $region69: #{tpu_custom_call.1} parent=63 // pred_check
          %p1029 = pneg %p282
        $region70: #{tpu_custom_call.1} parent=63 // pred_check_branch
          %1031 = sbr.rel (%p1029) target = $region72
        $region71: #{tpu_custom_call.1} parent=63 // pred_region
          _
        $region72: #{tpu_custom_call.1} parent=63 // pred_fallthru
          _
      $region64: #{tpu_custom_call.1} parent=5 // pred_fallthru
        _
      %p1032 = scmp.le.s32.totalorder 2, %s18
      // Predicated region
      $region73: #{tpu_custom_call.1} parent=5 // pred_check
        %p1033 = pneg %p1032
      $region74: #{tpu_custom_call.1} parent=5 // pred_check_branch
        %1035 = sbr.rel (%p1033) target = $region76
      $region75: #{tpu_custom_call.1} parent=5 // pred_region
        %s1036 = ssub.s32 %s18, 2
        // Predicated region
        $region77: #{tpu_custom_call.1} parent=75 // pred_check
          %p1037 = pneg %p288
        $region78: #{tpu_custom_call.1} parent=75 // pred_check_branch
          %1039 = sbr.rel (%p1037) target = $region80
        $region79: #{tpu_custom_call.1} parent=75 // pred_region
          %p1040 = scmp.lt.s32.totalorder %s24, 4
          %s1041 = scalar_select %p1040, %s24, 4
          %s1042 = smul.addr %s1041, 8
          %s1043 = scalar_lea.vmem %s11, %s1042
        $region80: #{tpu_custom_call.1} parent=75 // pred_fallthru
          _
      $region76: #{tpu_custom_call.1} parent=5 // pred_fallthru
        _
    $region6: #{tpu_custom_call.1} parent=1 // loop_footer
      %s22 = sadd.s32 1, %s18
    $region7: #{tpu_custom_call.1} parent=1 // loop_footer_branch
      %17 = sbr.rel target = $region3
    $region8: #{tpu_custom_call.1} parent=1 // loop_exit
      _
    %1044 = vsyncpa [#allocation3], 1
    %s1045 = scalar_lea.sflag [#allocation3], 1
    %1046 = vsyncpa %s1045, 1

</llo_original>
